<compile_context>
chip_gen: v5e
topology: v5e:2x2
jax: 0.10.0
libtpu: 0.0.40
codegen_flags: <defaults>
</compile_context>

<pallas_src>
import functools

import jax
import jax.numpy as jnp
from jax import lax
from jax.experimental import pallas as pl
from jax.experimental.pallas import tpu as pltpu


_LANES = 128
_SUBLANES = 8
_REC_BUFFER_BYTES = 4 * 1024 * 1024    # target size of one input DMA buffer
_REC_VMEM_LIMIT = 32 * 1024 * 1024     # 2 inputs x 2 bufs x 4MiB + headroom
_CLUST_BUFFER_BYTES = 2 * 1024 * 1024


def _round_up(v, m):
    return ((v + m - 1) // m) * m


def _cdiv(a, b):
    return -(-a // b)


def _rec_partial_kernel(x_ref, a_ref, out_ref, *, rows_total, ragged):
    """Per-tile partial sum of (x - a)^2 into one lane-dense (8, 128) block.

    Slice-wise fused accumulation: per (chunk, 128) slice, upcast to f32,
    square the difference and add into a vreg-resident accumulator (no
    full-tile f32 intermediates in VMEM).  Out-of-range rows of a ragged last
    tile contain garbage and are masked before accumulation.
    """
    row_tile, cols = x_ref.shape
    lane_groups = cols // _LANES
    min_item = min(jnp.dtype(x_ref.dtype).itemsize, jnp.dtype(a_ref.dtype).itemsize)
    chunk = max(_SUBLANES, 32 // min_item)       # native sublane multiple
    tile_base = pl.program_id(0) * row_tile

    if row_tile % chunk == 0 and row_tile >= chunk:
        num_chunks = row_tile // chunk
        row_iota = lax.broadcasted_iota(jnp.int32, (chunk, _LANES), 0)

        def body(r, part):
            base = pl.multiple_of(r * chunk, chunk)
            acc = None
            for g in range(lane_groups):
                xg = x_ref[pl.ds(base, chunk), pl.ds(g * _LANES, _LANES)].astype(jnp.float32)
                ag = a_ref[pl.ds(base, chunk), pl.ds(g * _LANES, _LANES)].astype(jnp.float32)
                d = xg - ag
                d2 = d * d
                acc = d2 if acc is None else acc + d2
            if ragged:
                valid = rows_total - tile_base - base        # scalar int32
                acc = jnp.where(row_iota < valid, acc, 0.0)
            return part + acc

        part = lax.fori_loop(0, num_chunks, body,
                             jnp.zeros((chunk, _LANES), jnp.float32))
        folded = part[0:_SUBLANES, :]
        for r in range(1, chunk // _SUBLANES):
            folded = folded + part[r * _SUBLANES:(r + 1) * _SUBLANES, :]
        out_ref[...] = folded
    else:
        # Tiny tile (fewer rows than the native sublane multiple): direct form.
        d = x_ref[...].astype(jnp.float32) - a_ref[...].astype(jnp.float32)
        d2 = d * d
        if ragged:  # defensive; tiny tiles are always a single full block
            rid = lax.broadcasted_iota(jnp.int32, (row_tile, cols), 0)
            d2 = jnp.where(rid < rows_total - tile_base, d2, 0.0)
        total = jnp.sum(d2)
        ri = lax.broadcasted_iota(jnp.int32, (_SUBLANES, _LANES), 0)
        ci = lax.broadcasted_iota(jnp.int32, (_SUBLANES, _LANES), 1)
        out_ref[...] = jnp.where(jnp.logical_and(ri == 0, ci == 0), total, 0.0)


def _clust_partial_kernel(h_ref, c_ref, out_ref, *, k, n_total, ragged):
    """Per-tile sum_i min_j ||h_i - c_j||^2 written into out[0, 0] (rest 0)."""
    tile_n, _ = h_ref.shape
    h = h_ref[...].astype(jnp.float32)           # (tile_n, D)
    c = c_ref[...].astype(jnp.float32)           # (K, D)

    def d2_to(j):
        diff = h - c[j:j + 1, :]
        return jnp.sum(diff * diff, axis=-1, keepdims=True)      # (tile_n, 1)

    min_d2 = d2_to(0)
    for j in range(1, k):
        min_d2 = jnp.minimum(min_d2, d2_to(j))
    # TODO(synk): for large K (>= ~128) switch to the MXU ||h||^2 - 2 h c^T +
    # ||c||^2 form (and for small D / huge N, re-lay h with N on lanes); the
    # VPU form is the right choice for the small K / latent this module uses.
    if ragged:
        valid = n_total - pl.program_id(0) * tile_n
        rid = lax.broadcasted_iota(jnp.int32, (tile_n, 1), 0)
        min_d2 = jnp.where(rid < valid, min_d2, 0.0)
    total = jnp.sum(min_d2)
    ri = lax.broadcasted_iota(jnp.int32, (_SUBLANES, _LANES), 0)
    ci = lax.broadcasted_iota(jnp.int32, (_SUBLANES, _LANES), 1)
    out_ref[...] = jnp.where(jnp.logical_and(ri == 0, ci == 0), total, 0.0)


def _choose_cols(n_elems):
    for cols in (1024, 512, 256, 128):
        if n_elems % cols == 0:
            return cols
    return None


def dkn_loss(x, h_x, a_x, cluster_centers, lambda_cl=1.0):
    """Pallas implementation of DKNLoss.forward. Returns a scalar f32."""
    # ---------------- reconstruction term ----------------
    n_elems = int(x.size)
    assert int(a_x.size) == n_elems

    x_flat = x.reshape(-1)        # free view of the contiguous buffer
    a_flat = a_x.reshape(-1)
    cols = _choose_cols(n_elems)
    if cols is None:
        # TODO(synk): n_elems % 128 != 0 is the one remaining case that pays a
        # pad copy (to 128-lane granularity only); never fires for typical
        # image/feature shapes.
        cols = _LANES
        pad = _round_up(n_elems, cols) - n_elems
        x_flat = jnp.pad(x_flat, (0, pad))
        a_flat = jnp.pad(a_flat, (0, pad))
    rows = int(x_flat.size) // cols
    x2 = x_flat.reshape(rows, cols)
    a2 = a_flat.reshape(rows, cols)

    item_x = jnp.dtype(x2.dtype).itemsize
    item_a = jnp.dtype(a2.dtype).itemsize
    sub = max(_SUBLANES, 32 // min(item_x, item_a))     # native sublane multiple
    budget_rows = max(sub, (_REC_BUFFER_BYTES // (cols * max(item_x, item_a)))
                      // sub * sub)
    if rows < sub:
        row_tile = rows                                  # single full-dim block
    else:
        row_tile = min(budget_rows, (rows // sub) * sub)
        # Give v7x's two TensorCores >= 2 tiles on mid-size inputs.
        if _cdiv(rows, row_tile) == 1 and rows >= 2 * sub:
            row_tile = max(sub, _round_up(_cdiv(rows, 2), sub))
    num_tiles = _cdiv(rows, row_tile)
    ragged = (rows % row_tile) != 0

    rec_cost = pl.CostEstimate(
        flops=3 * n_elems,
        transcendentals=0,
        bytes_accessed=n_elems * (item_x + item_a)
        + num_tiles * _SUBLANES * _LANES * 4,
    )
    rec_partials = pl.pallas_call(
        functools.partial(_rec_partial_kernel, rows_total=rows, ragged=ragged),
        out_shape=jax.ShapeDtypeStruct((num_tiles * _SUBLANES, _LANES), jnp.float32),
        grid=(num_tiles,),
        in_specs=[
            pl.BlockSpec((row_tile, cols), lambda i: (i, 0)),
            pl.BlockSpec((row_tile, cols), lambda i: (i, 0)),
        ],
        out_specs=pl.BlockSpec((_SUBLANES, _LANES), lambda i: (i, 0)),
        compiler_params=pltpu.CompilerParams(
            dimension_semantics=("parallel",),
            vmem_limit_bytes=_REC_VMEM_LIMIT),
        cost_estimate=rec_cost,
    )(x2, a2)
    loss_rec = jnp.sum(rec_partials) / jnp.float32(n_elems)

    # ---------------- clustering term ----------------
    n_lat, d_lat = h_x.shape
    k = int(cluster_centers.shape[0])
    cap = max(_SUBLANES,
              (_CLUST_BUFFER_BYTES // (d_lat * 4)) // _SUBLANES * _SUBLANES)
    tile_n = n_lat if n_lat <= cap else cap
    num_ct = _cdiv(n_lat, tile_n)
    c_ragged = (n_lat % tile_n) != 0

    clust_partials = pl.pallas_call(
        functools.partial(_clust_partial_kernel, k=k, n_total=n_lat,
                          ragged=c_ragged),
        out_shape=jax.ShapeDtypeStruct((num_ct * _SUBLANES, _LANES), jnp.float32),
        grid=(num_ct,),
        in_specs=[
            pl.BlockSpec((tile_n, d_lat), lambda i: (i, 0)),
            pl.BlockSpec((k, d_lat), lambda i: (0, 0)),     # centers replicated
        ],
        out_specs=pl.BlockSpec((_SUBLANES, _LANES), lambda i: (i, 0)),
        compiler_params=pltpu.CompilerParams(
            dimension_semantics=("parallel",)),
    )(h_x, cluster_centers)
    loss_clust = jnp.sum(clust_partials) / jnp.float32(n_lat * d_lat)

    return loss_rec + jnp.float32(lambda_cl) * loss_clust


def _reference(x, h_x, a_x, centers, lambda_cl=1.0):
    """Pure-JAX reference mirroring the PyTorch forward exactly."""
    loss_rec = jnp.mean((x - a_x) ** 2)
    d = jnp.sqrt(jnp.maximum(
        jnp.sum((h_x[:, None, :] - centers[None, :, :]) ** 2, axis=-1), 0.0))
    assign = jnp.argmin(d, axis=1)
    r_x = centers[assign]
    loss_clust = jnp.mean((h_x - r_x) ** 2)
    return loss_rec + lambda_cl * loss_clust


if __name__ == "__main__":
    # Small, deterministic example shapes consistent with the module:
    # images x / a_x: (B=2, C=4, H=16, W=16); latents h_x: (B=2, latent=32);
    # k=4 cluster centers of size latent=32.
    key = jax.random.PRNGKey(0)
    k_x, k_a, k_h, k_c = jax.random.split(key, 4)

    B, C, H, W = 2, 4, 16, 16
    latent, k = 32, 4
    lambda_cl = 1.0

    x = jax.random.normal(k_x, (B, C, H, W), dtype=jnp.float32)
    a_x = jax.random.normal(k_a, (B, C, H, W), dtype=jnp.float32)
    h_x = jax.random.normal(k_h, (B, latent), dtype=jnp.float32)
    # torch.rand -> uniform [0, 1); deterministic in-script init.
    cluster_centers = jax.random.uniform(k_c, (k, latent), dtype=jnp.float32)

    loss = dkn_loss(x, h_x, a_x, cluster_centers, lambda_cl)
    loss = jax.block_until_ready(loss)

    ref = _reference(x, h_x, a_x, cluster_centers, lambda_cl)
    assert jnp.allclose(loss, ref, rtol=1e-5, atol=1e-5), (loss, ref)

    print("KERNEL_OK")
</pallas_src>

<mosaic_0001>
module attributes {stable_mosaic.version = 11 : i64} {
  func.func @_rec_partial_kernel(%arg0: i32, %arg1: memref<2x1024xf32, #tpu.memory_space<vmem>>, %arg2: memref<2x1024xf32, #tpu.memory_space<vmem>>, %arg3: memref<8x128xf32, #tpu.memory_space<vmem>>) attributes {dimension_semantics = [#tpu.dimension_semantics<parallel>], iteration_bounds = array<i64: 1>, scalar_prefetch = 0 : i64, scratch_operands = 0 : i64, tpu.core_type = #tpu.core_type<tc>, window_params = [{transform_indices = @transform_0, window_bounds = array<i64: 2, 1024>}, {transform_indices = @transform_1, window_bounds = array<i64: 2, 1024>}, {transform_indices = @transform_2, window_bounds = array<i64: 8, 128>}]} {
    %c0 = arith.constant 0 : index
    %c0_0 = arith.constant 0 : index
    %0 = vector.load %arg1[%c0, %c0_0] : memref<2x1024xf32, #tpu.memory_space<vmem>>, vector<2x1024xf32>
    %c0_1 = arith.constant 0 : index
    %c0_2 = arith.constant 0 : index
    %1 = vector.load %arg2[%c0_1, %c0_2] : memref<2x1024xf32, #tpu.memory_space<vmem>>, vector<2x1024xf32>
    %2 = arith.subf %0, %1 : vector<2x1024xf32>
    %3 = arith.mulf %2, %2 : vector<2x1024xf32>
    %4 = vector.shape_cast %3 : vector<2x1024xf32> to vector<1x2x1024xf32>
    %cst = arith.constant dense<0.000000e+00> : vector<1xf32>
    %5 = vector.multi_reduction <add>, %4, %cst [1, 2] : vector<1x2x1024xf32> to vector<1xf32>
    %6 = vector.shape_cast %5 : vector<1xf32> to vector<1x1x1xf32>
    %7 = vector.extract %6[0, 0, 0] : f32 from vector<1x1x1xf32>
    %8 = tpu.iota {dimensions = array<i32: 0>} : vector<8x128xi32>
    %9 = tpu.iota {dimensions = array<i32: 1>} : vector<8x128xi32>
    %c0_i32 = arith.constant 0 : i32
    %10 = vector.broadcast %c0_i32 : i32 to vector<8x128xi32>
    %11 = arith.cmpi eq, %8, %10 : vector<8x128xi32>
    %c0_i32_3 = arith.constant 0 : i32
    %12 = vector.broadcast %c0_i32_3 : i32 to vector<8x128xi32>
    %13 = arith.cmpi eq, %9, %12 : vector<8x128xi32>
    %14 = arith.andi %11, %13 : vector<8x128xi1>
    %cst_4 = arith.constant 0.000000e+00 : f32
    %15 = vector.broadcast %7 : f32 to vector<8x128xf32>
    %16 = vector.broadcast %cst_4 : f32 to vector<8x128xf32>
    %17 = arith.select %14, %15, %16 : vector<8x128xi1>, vector<8x128xf32>
    %c0_5 = arith.constant 0 : index
    %c0_6 = arith.constant 0 : index
    %18 = vector.load %arg3[%c0_5, %c0_6] : memref<8x128xf32, #tpu.memory_space<vmem>>, vector<8x128xf32>
    tpu.vector_store %arg3[%c0_5, %c0_6], %17 {strides = array<i32>} : memref<8x128xf32, #tpu.memory_space<vmem>>, vector<8x128xf32>,
    return
  }
  func.func @transform_0(%arg0: i32) -> (i32, i32) {
    %c0_i32 = arith.constant 0 : i32
    %c0_i32_0 = arith.constant 0 : i32
    return %arg0, %c0_i32 : i32, i32
  }
  func.func @transform_1(%arg0: i32) -> (i32, i32) {
    %c0_i32 = arith.constant 0 : i32
    %c0_i32_0 = arith.constant 0 : i32
    return %arg0, %c0_i32 : i32, i32
  }
  func.func @transform_2(%arg0: i32) -> (i32, i32) {
    %c0_i32 = arith.constant 0 : i32
    %c0_i32_0 = arith.constant 0 : i32
    return %arg0, %c0_i32 : i32, i32
  }
}

</mosaic_0001>

<llo_original>
// kernel: tpu_custom_call.1
$region0: #{tpu_custom_call.1}
  #allocation0 [shape = 'u32[]', space=smem, size = 0x4, offset = 0x4, fixed_abs, tag = 'smem constant byte address 0x4 - core index']
  #allocation1 [shape = 'u32[72,128]{1,0:T(1,128)}', space=vmem, size = 0x9000, scoped, tag = 'internal scratch']
  %s0 = inlined_call_operand.hbm [shape: f32[2,1024], index: 0, kind: input, shape index: {}]
  %s1 = inlined_call_operand.hbm [shape: f32[2,1024], index: 1, kind: input, shape index: {}]
  %s2 = inlined_call_operand.hbm [shape: f32[8,128], index: 2, kind: output, shape index: {}]
  %s3 = sld [smem:[#allocation0]]
  $region26: #{tpu_custom_call.1} parent=0
    _
  %s5 = ssub.s32 1, %s3
  %s6 = scalar_select 0, %s5, %s3
  $region1: #{tpu_custom_call.1} parent=0
    #allocation2 [shape = 'u8[8192]{0}', space=vmem, size = 0x2000, scoped, tag = 'input window, operand 0, single buffered']
    #allocation3 [shape = 's32[1]{0}', space=sflag, size = 0x4, scoped, tag = 'scoped memory for tpu_custom_call.1']
    #allocation4 [shape = 's32[1]{0}', space=sflag, size = 0x4, scoped, tag = 'scoped memory for tpu_custom_call.1']
    #allocation5 [shape = 'u8[8192]{0}', space=vmem, size = 0x2000, scoped, tag = 'input window, operand 1, single buffered']
    #allocation6 [shape = 's32[1]{0}', space=sflag, size = 0x4, scoped, tag = 'scoped memory for tpu_custom_call.1']
    #allocation7 [shape = 'u8[4096]{0}', space=vmem, size = 0x1000, scoped, tag = 'output window, operand 0, single buffered']
    %7 = vsyncpa [#allocation3], 0
    %8 = vsyncpa [#allocation6], 0
    %9 = vsyncpa [#allocation4], 0
    // Predicated region
    $region2: #{tpu_custom_call.1} parent=1 // pred_check
      _
    $region3: #{tpu_custom_call.1} parent=1 // pred_check_branch
      %11 = sbr.rel (0) target = $region5
    $region4: #{tpu_custom_call.1} parent=1 // pred_region
      %13 = vsyncadd [#allocation3], 0
      %s15 = sshll.u32 %s0, 4
      %s16 = int_to_ptr.hbm [resolvable:$true] %s15
      %s17 = sshll.u32 [#allocation2], 4
      %s18 = int_to_ptr.vmem [resolvable:$true] %s17
      %20 = dma.hbm_to_vmem [thread:$0]  %s16, 256, %s18, [#allocation3]
    $region5: #{tpu_custom_call.1} parent=1 // pred_fallthru
      _
    // Predicated region
    $region6: #{tpu_custom_call.1} parent=1 // pred_check
      _
    $region7: #{tpu_custom_call.1} parent=1 // pred_check_branch
      %22 = sbr.rel (0) target = $region9
    $region8: #{tpu_custom_call.1} parent=1 // pred_region
      %24 = vsyncadd [#allocation6], 0
      %s26 = sshll.u32 %s1, 4
      %s27 = int_to_ptr.hbm [resolvable:$true] %s26
      %s28 = sshll.u32 [#allocation5], 4
      %s29 = int_to_ptr.vmem [resolvable:$true] %s28
      %31 = dma.hbm_to_vmem [thread:$0]  %s27, 256, %s29, [#allocation6]
    $region9: #{tpu_custom_call.1} parent=1 // pred_fallthru
      _
    // Predicated region
    $region10: #{tpu_custom_call.1} parent=1 // pred_check
      _
    $region11: #{tpu_custom_call.1} parent=1 // pred_check_branch
      %33 = sbr.rel (0) target = $region13
    $region12: #{tpu_custom_call.1} parent=1 // pred_region
      %35 = dma.done [#allocation3], 256
    $region13: #{tpu_custom_call.1} parent=1 // pred_fallthru
      _
    // Predicated region
    $region14: #{tpu_custom_call.1} parent=1 // pred_check
      _
    $region15: #{tpu_custom_call.1} parent=1 // pred_check_branch
      %37 = sbr.rel (0) target = $region17
    $region16: #{tpu_custom_call.1} parent=1 // pred_region
      %39 = dma.done [#allocation6], 256
    $region17: #{tpu_custom_call.1} parent=1 // pred_fallthru
      _
    %v40 = vld [vmem:[#allocation2] sm:$0xff]
    %v41 = vld [vmem:[#allocation2 + $0x8] sm:$0xff]
    %v42 = vld [vmem:[#allocation5] sm:$0xff]
    %v43 = vld [vmem:[#allocation5 + $0x8] sm:$0xff]
    %v44 = vsub.f32 %v40, %v42
    %v45 = vsub.f32 %v41, %v43
    %v46 = vmul.f32 %v44, %v44
    %v47 = vmul.f32 %v45, %v45
    %50 = vst [vmem:[#allocation1] ss:$4 sm:$0xff] %v46
    %s51 = scalar_lea.vmem [#allocation1], 32
    %52 = vst [vmem:[%s51] ss:$4 sm:$0xff] %v47
    %v53 = vld.sshfl [vmem:[#allocation1] sm:$0xff pattern:$0x73625140]
    %v54 = vld.sshfl [vmem:[#allocation1 + $0x8] sm:$0xff pattern:$0x73625140]
    %v55 = vld.sshfl [vmem:[#allocation1 + $0x10] sm:$0xff pattern:$0x73625140]
    %v56 = vld.sshfl [vmem:[#allocation1 + $0x18] sm:$0xff pattern:$0x73625140]
    %v57 = vld.sshfl [vmem:[#allocation1 + $0x20] sm:$0xff pattern:$0x73625140]
    %v58 = vld.sshfl [vmem:[#allocation1 + $0x28] sm:$0xff pattern:$0x73625140]
    %v59 = vld.sshfl [vmem:[#allocation1 + $0x30] sm:$0xff pattern:$0x73625140]
    %v60 = vld.sshfl [vmem:[#allocation1 + $0x38] sm:$0xff pattern:$0x73625140]
    %vm69 = vcmask 1041408
    %v70 = vsel %vm69, %v53, 0.0
    %v71 = vsel %vm69, %v54, 0.0
    %v72 = vadd.f32 %v70, %v71
    %v73 = vsel %vm69, %v55, 0.0
    %v74 = vadd.f32 %v72, %v73
    %v75 = vsel %vm69, %v56, 0.0
    %v76 = vadd.f32 %v74, %v75
    %v77 = vsel %vm69, %v57, 0.0
    %v78 = vadd.f32 %v76, %v77
    %v79 = vsel %vm69, %v58, 0.0
    %v80 = vadd.f32 %v78, %v79
    %v81 = vsel %vm69, %v59, 0.0
    %v82 = vadd.f32 %v80, %v81
    %v83 = vsel %vm69, %v60, 0.0
    %v84 = vadd.f32 %v82, %v83
    %85 = vadd.xlane.f32.xlu0 %v84
    %v86 = vpop.xlane.xlu0 %85
    %v87 = vrot.slane %v86, 4
    %v88 = vadd.f32 %v86, %v87
    %v89 = vrot.slane %v88, 2
    %v90 = vadd.f32 %v88, %v89
    %v91 = vrot.slane %v90, 1
    %v92 = vadd.f32 %v90, %v91
    %s93 = vtos %v92
    %v94 = vlaneseq
    %v95 = vshrl.u32 %v94, 7
    %v96 = vlaneseq
    %v97 = vand.u32 %v96, 127
    %vm98 = vcmp.eq.s32.totalorder %v95, 0
    %vm99 = vcmp.eq.s32.totalorder %v97, 0
    %vm100 = vmand %vm98, %vm99
    %v101 = vstv %s93
    %v102 = vsel %vm100, %v101, 0.0
    %103 = vst [vmem:[#allocation7] sm:$0xff] %v102
    // Predicated region
    $region18: #{tpu_custom_call.1} parent=1 // pred_check
      _
    $region19: #{tpu_custom_call.1} parent=1 // pred_check_branch
      %105 = sbr.rel (0) target = $region21
    $region20: #{tpu_custom_call.1} parent=1 // pred_region
      %107 = vsyncadd [#allocation4], 0
      %s109 = sshll.u32 [#allocation7], 4
      %s110 = int_to_ptr.vmem [resolvable:$true] %s109
      %s111 = sshll.u32 %s2, 4
      %s112 = int_to_ptr.hbm [resolvable:$true] %s111
      %114 = dma.vmem_to_hbm [thread:$0]  %s110, 128, %s112, [#allocation4]
    $region21: #{tpu_custom_call.1} parent=1 // pred_fallthru
      _
    // Predicated region
    $region22: #{tpu_custom_call.1} parent=1 // pred_check
      _
    $region23: #{tpu_custom_call.1} parent=1 // pred_check_branch
      %116 = sbr.rel (0) target = $region25
    $region24: #{tpu_custom_call.1} parent=1 // pred_region
      %118 = dma.done [#allocation4], 128
    $region25: #{tpu_custom_call.1} parent=1 // pred_fallthru
      _
    %119 = vsyncpa [#allocation3], 1
    %120 = vsyncpa [#allocation6], 1
    %121 = vsyncpa [#allocation4], 1

</llo_original>
